<compile_context>
chip_gen: v7x
topology: tpu7x:2x2x1
jax: 0.10.0
libtpu: 0.0.40
codegen_flags: <defaults>
</compile_context>

<pallas_src>
import jax
import jax.numpy as jnp
from jax.experimental import pallas as pl
from jax.experimental.pallas import tpu as pltpu

# ---- small, module-consistent config -------------------------------------
HIDDEN = 32          # hidden_size
EMBED = 16           # embedding_size
VOCAB = 64           # input_size == output_size == len(english.vocab)
SEQ = 8              # encoder sequence length
BATCH = 2            # batch size N (serving could raise to 8 to fill sublanes)
NUM_LAYERS = 1
DROPOUT_P = 0.0      # inference: nn.Dropout is identity
LANE = 128           # TPU lane width; 4*HIDDEN == LANE and VOCAB pads to LANE

assert 4 * HIDDEN == LANE and VOCAB <= LANE

# ---- packed parameter slab layout (rows of a (SLAB_ROWS, 128) f32 array) ---
ROW_WG = 0                              # [0,112): LSTM weights  [W_ctx;W_emb;W_hh]
ROW_WFC = 2 * HIDDEN + EMBED + HIDDEN   # 112: fc weights (H rows, lane-padded)
ROW_BG = ROW_WFC + HIDDEN               # 144: gate bias (b_ih + b_hh)
ROW_BFC = ROW_BG + 1                    # 145: fc bias (lane-padded)
ROW_ATT = ROW_BFC + 1                   # 146: attention row [w_h | w_e | b_e | 0]
SLAB_ROWS = ((ROW_ATT + 1 + 7) // 8) * 8   # 152 (sublane-aligned)


def decoder_step_kernel(tok_ref,        # (T, N) int32   SMEM (scalar prefetch)
                        emb_tbl_ref,    # (V, E)         VMEM, resident
                        enc_ref,        # (N, S, 2H)     VMEM, resident
                        slab_ref,       # (SLAB_ROWS,128) VMEM, resident params
                        state0_ref,     # (N, 128)       VMEM, resident [h0|c0|0]
                        preds_ref,      # (N, 128) block of (T, N, 128) output
                        state_ref):     # (N, 128) resident output [h|c|0]
    H, E, V = HIDDEN, EMBED, VOCAB
    H2 = 2 * H
    N = state0_ref.shape[0]
    t = pl.program_id(0)

    # ---- initialize recurrent state from packed input on step 0 -----------
    @pl.when(t == 0)
    def _():
        state_ref[...] = state0_ref[...]

    state = state_ref[...]                                  # (N, 128)
    h0 = state[:, 0:H]                                      # (N, H)
    c0 = state[:, H:H2]                                     # (N, H)

    # ---- static sublane slices of the packed parameter slab ----------------
    w_ctx = slab_ref[ROW_WG:ROW_WG + H2, :]                 # (2H, 4H)
    w_emb = slab_ref[ROW_WG + H2:ROW_WG + H2 + E, :]        # (E, 4H)
    w_hh = slab_ref[ROW_WG + H2 + E:ROW_WG + H2 + E + H, :]  # (H, 4H)
    w_fc = slab_ref[ROW_WFC:ROW_WFC + H, :]                 # (H, 128)
    b_g = slab_ref[ROW_BG:ROW_BG + 1, :]                    # (1, 128)
    b_fc = slab_ref[ROW_BFC:ROW_BFC + 1, :]                 # (1, 128)
    w_att = slab_ref[ROW_ATT:ROW_ATT + 1, :]                # (1, 128)
    w_att_h = w_att[:, 0:H]                                 # (1, H)
    w_att_e = w_att[:, H:3 * H]                             # (1, 2H)
    b_att = w_att[:, 3 * H:3 * H + 1]                       # (1, 1)

    # ---- embedding lookup: in-kernel gather via one-hot MXU matvec ----------
    onehot_rows = []
    for b in range(N):
        tok_b = tok_ref[t, b]
        onehot_rows.append(
            (jax.lax.broadcasted_iota(jnp.int32, (1, V), 1) == tok_b)
            .astype(jnp.float32))
    onehot = jnp.concatenate(onehot_rows, axis=0)           # (N, V)
    emb = jnp.dot(onehot, emb_tbl_ref[...],
                  preferred_element_type=jnp.float32)       # (N, E)
    # TODO(synk): training-mode dropout on the embedding is not implemented.

    # ---- attention energy: relu(w_h.h + w_e.enc_s + b) (VPU + lane reduce) --
    enc = enc_ref[...]                                      # (N, S, 2H)
    e_h = jnp.sum(h0 * w_att_h, axis=-1, keepdims=True)     # (N, 1)
    e_enc = jnp.sum(enc * w_att_e[None, :, :], axis=-1)     # (N, S)
    energy = jnp.maximum(e_enc + e_h + b_att, 0.0)          # (N, S)

    # ---- softmax over the sequence axis (lane axis) -------------------------
    m = jnp.max(energy, axis=-1, keepdims=True)
    ex = jnp.exp(energy - m)
    attn = ex / jnp.sum(ex, axis=-1, keepdims=True)         # (N, S)

    # ---- context vector: ctx[n,:] = sum_s attn[n,s] * enc[n,s,:] ------------
    ctx = jnp.sum(attn[:, :, None] * enc, axis=1)           # (N, 2H)

    # ---- single-step LSTM: three MXU pushes, no lane concatenation ----------
    gates = (jnp.dot(ctx, w_ctx, preferred_element_type=jnp.float32)
             + jnp.dot(emb, w_emb, preferred_element_type=jnp.float32)
             + jnp.dot(h0, w_hh, preferred_element_type=jnp.float32)
             + b_g)                                         # (N, 4H)

    # whole-vreg transcendentals (EUP), then static lane slices
    sg = jax.nn.sigmoid(gates)
    tg = jnp.tanh(gates)
    i_g = sg[:, 0:H]                  # PyTorch gate order: i, f, g, o
    f_g = sg[:, H:2 * H]
    g_g = tg[:, 2 * H:3 * H]
    o_g = sg[:, 3 * H:4 * H]

    c1 = f_g * c0 + i_g * g_g
    h1 = o_g * jnp.tanh(c1)

    # ---- lane-dense packed state update (pad lanes stay 0 from step-0 init) -
    state_ref[:, 0:H] = h1
    state_ref[:, H:H2] = c1

    # ---- output projection (fc), lane-dense (padded to 128) -----------------
    preds_ref[...] = (jnp.dot(h1, w_fc, preferred_element_type=jnp.float32)
                      + b_fc)


def pack_params(params):
    """One-time packing of all module parameters (hoisted out of decode)."""
    H, E, V = HIDDEN, EMBED, VOCAB
    wg = jnp.concatenate([params["wih"], params["whh"]], axis=0)       # (112,128)
    wfc = jnp.pad(params["wfc"], ((0, 0), (0, LANE - V)))              # (32, 128)
    b_g = params["bih"] + params["bhh"]                                # (1, 128)
    b_fc = jnp.pad(params["bfc"], ((0, 0), (0, LANE - V)))             # (1, 128)
    watt = params["we_w"].reshape(1, 3 * H)                            # (1, 96)
    att_row = jnp.concatenate(
        [watt, params["we_b"].reshape(1, 1),
         jnp.zeros((1, LANE - 3 * H - 1), jnp.float32)], axis=1)       # (1, 128)
    slab = jnp.concatenate([wg, wfc, b_g, b_fc, att_row], axis=0)      # (147,128)
    slab = jnp.pad(slab, ((0, SLAB_ROWS - slab.shape[0]), (0, 0)))     # (152,128)
    emb_table = params["embedding"].astype(jnp.float32)                # (V, E)
    return emb_table, slab


def decoder_decode(tokens, encoder_states, hidden, cell, packed):
    """Fused T-step teacher-forced decode in ONE pallas_call.

    tokens: (T, N) int32; encoder_states: (S, N, 2H); hidden/cell: (1, N, H).
    Returns (preds (T, N, V), hidden (1, N, H), cell (1, N, H)).
    """
    emb_table, slab = packed
    T, N = tokens.shape
    S = encoder_states.shape[0]
    H = HIDDEN

    # hoisted, per-decode (not per-step) layout plumbing
    enc_nse = jnp.transpose(encoder_states, (1, 0, 2))                 # (N, S, 2H)
    state0 = jnp.concatenate(
        [hidden[0], cell[0], jnp.zeros((N, LANE - 2 * H), jnp.float32)],
        axis=-1)                                                       # (N, 128)

    grid_spec = pltpu.PrefetchScalarGridSpec(
        num_scalar_prefetch=1,                 # tokens -> SMEM, once
        grid=(T,),
        in_specs=[
            pl.BlockSpec((VOCAB, EMBED), lambda t, tok: (0, 0)),       # resident
            pl.BlockSpec((N, S, 2 * H), lambda t, tok: (0, 0, 0)),     # resident
            pl.BlockSpec((SLAB_ROWS, LANE), lambda t, tok: (0, 0)),    # resident
            pl.BlockSpec((N, LANE), lambda t, tok: (0, 0)),            # resident
        ],
        out_specs=(
            pl.BlockSpec((None, N, LANE), lambda t, tok: (t, 0, 0)),   # per-step
            pl.BlockSpec((N, LANE), lambda t, tok: (0, 0)),            # resident
        ),
    )

    preds_pad, state_out = pl.pallas_call(
        decoder_step_kernel,
        grid_spec=grid_spec,
        out_shape=(
            jax.ShapeDtypeStruct((T, N, LANE), jnp.float32),           # padded preds
            jax.ShapeDtypeStruct((N, LANE), jnp.float32),              # [h | c | 0]
        ),
        compiler_params=pltpu.CompilerParams(
            dimension_semantics=("arbitrary",)),   # sequential recurrence over T
    )(tokens, emb_table, enc_nse, slab, state0)

    preds = preds_pad[:, :, :VOCAB]
    h1 = state_out[:, 0:H][None]
    c1 = state_out[:, H:2 * H][None]
    return preds, h1, c1


def decoder_forward(x_tok, encoder_states, hidden, cell, packed):
    """Single decode step == the PyTorch Decoder.forward (eval mode)."""
    preds, h1, c1 = decoder_decode(x_tok[None, :], encoder_states,
                                   hidden, cell, packed)
    return preds[0], h1, c1


def decoder_reference(x_tok, enc, hidden, cell, params):
    """Pure-JAX replica of the PyTorch forward (eval mode), on the raw params."""
    emb = params["embedding"][x_tok][None]                             # (1, N, E)
    S = enc.shape[0]
    H = hidden.shape[-1]
    h_shaped = jnp.tile(hidden, (S, 1, 1))                             # (S, N, H)
    cat = jnp.concatenate([h_shaped, enc], axis=2)                     # (S, N, 3H)
    energy = jax.nn.relu(cat @ params["we_w"] + params["we_b"])        # (S, N, 1)
    attention = jax.nn.softmax(energy, axis=0)
    ctx = jnp.einsum("snk,snl->knl", attention, enc)                   # (1, N, 2H)
    rnn_in = jnp.concatenate([ctx, emb], axis=2)[0]                    # (N, 2H+E)
    h0, c0 = hidden[0], cell[0]
    gates = (rnn_in @ params["wih"] + params["bih"]
             + h0 @ params["whh"] + params["bhh"])
    i = jax.nn.sigmoid(gates[:, :H])
    f = jax.nn.sigmoid(gates[:, H:2 * H])
    g = jnp.tanh(gates[:, 2 * H:3 * H])
    o = jax.nn.sigmoid(gates[:, 3 * H:])
    c1 = f * c0 + i * g
    h1 = o * jnp.tanh(c1)
    preds = h1 @ params["wfc"] + params["bfc"]
    return preds, h1[None], c1[None]


def make_params(key):
    ks = jax.random.split(key, 8)
    H, E, V = HIDDEN, EMBED, VOCAB
    s = 0.1
    return {
        "embedding": s * jax.random.normal(ks[0], (V, E), jnp.float32),
        # energy = nn.Linear(3H, 1): stored transposed -> (3H, 1)
        "we_w": s * jax.random.normal(ks[1], (3 * H, 1), jnp.float32),
        "we_b": s * jax.random.normal(ks[2], (1, 1), jnp.float32),
        # LSTM(2H+E -> H): W_ih (2H+E, 4H), W_hh (H, 4H); PyTorch gate order i,f,g,o
        "wih": s * jax.random.normal(ks[3], (2 * H + E, 4 * H), jnp.float32),
        "bih": s * jax.random.normal(ks[4], (1, 4 * H), jnp.float32),
        "whh": s * jax.random.normal(ks[5], (H, 4 * H), jnp.float32),
        "bhh": s * jax.random.normal(ks[6], (1, 4 * H), jnp.float32),
        # fc = nn.Linear(H, V): stored transposed -> (H, V)
        "wfc": s * jax.random.normal(ks[7], (H, V), jnp.float32),
        "bfc": jnp.zeros((1, V), jnp.float32),
    }


if __name__ == "__main__":
    key = jax.random.PRNGKey(0)
    k_par, k_x, k_enc, k_h, k_c = jax.random.split(key, 5)

    params = make_params(k_par)
    packed = pack_params(params)          # packed ONCE at init (hoisted)

    T = 8                                 # decode steps fused into one call
    tokens = jax.random.randint(k_x, (T, BATCH), 0, VOCAB, dtype=jnp.int32)
    encoder_states = jax.random.normal(
        k_enc, (SEQ, BATCH, 2 * HIDDEN), jnp.float32)
    hidden = jax.random.normal(k_h, (NUM_LAYERS, BATCH, HIDDEN), jnp.float32)
    cell = jax.random.normal(k_c, (NUM_LAYERS, BATCH, HIDDEN), jnp.float32)

    # reference: T sequential single-step forwards on the raw params
    r_preds = []
    r_h, r_c = hidden, cell
    for t in range(T):
        p, r_h, r_c = decoder_reference(tokens[t], encoder_states, r_h, r_c, params)
        r_preds.append(p)
    r_preds = jnp.stack(r_preds, axis=0)

    # fused multi-step decode: ONE pallas_call for all T steps
    preds, h1, c1 = decoder_decode(tokens, encoder_states, hidden, cell, packed)
    jax.block_until_ready((preds, h1, c1))

    assert preds.shape == (T, BATCH, VOCAB)
    assert h1.shape == (NUM_LAYERS, BATCH, HIDDEN)
    assert c1.shape == (NUM_LAYERS, BATCH, HIDDEN)
    assert jnp.allclose(preds, r_preds, atol=1e-4, rtol=1e-4)
    assert jnp.allclose(h1, r_h, atol=1e-4, rtol=1e-4)
    assert jnp.allclose(c1, r_c, atol=1e-4, rtol=1e-4)

    # single-step wrapper (exact Decoder.forward semantics)
    p1, h_s, c_s = decoder_forward(tokens[0], encoder_states, hidden, cell, packed)
    jax.block_until_ready((p1, h_s, c_s))
    rp1, rh1, rc1 = decoder_reference(tokens[0], encoder_states, hidden, cell, params)
    assert p1.shape == (BATCH, VOCAB)
    assert jnp.allclose(p1, rp1, atol=2e-5, rtol=2e-5)
    assert jnp.allclose(h_s, rh1, atol=2e-5, rtol=2e-5)
    assert jnp.allclose(c_s, rc1, atol=2e-5, rtol=2e-5)

    print("KERNEL_OK")
</pallas_src>

<mosaic_0001>
module attributes {stable_mosaic.version = 11 : i64} {
  func.func @decoder_step_kernel(%arg0: i32, %arg1: memref<8x2xi32, #tpu.memory_space<smem>>, %arg2: memref<64x16xf32, #tpu.memory_space<vmem>>, %arg3: memref<2x8x64xf32, #tpu.memory_space<vmem>>, %arg4: memref<152x128xf32, #tpu.memory_space<vmem>>, %arg5: memref<2x128xf32, #tpu.memory_space<vmem>>, %arg6: memref<1x2x128xf32, #tpu.memory_space<vmem>>, %arg7: memref<2x128xf32, #tpu.memory_space<vmem>>) attributes {dimension_semantics = [#tpu.dimension_semantics<arbitrary>], iteration_bounds = array<i64: 8>, scalar_prefetch = 1 : i64, scratch_operands = 0 : i64, tpu.core_type = #tpu.core_type<tc>, window_params = [{pipeline_mode = #tpu.pipeline_mode<synchronous>, transform_indices = @transform_0, window_bounds = array<i64: 64, 16>}, {pipeline_mode = #tpu.pipeline_mode<synchronous>, transform_indices = @transform_1, window_bounds = array<i64: 2, 8, 64>}, {pipeline_mode = #tpu.pipeline_mode<synchronous>, transform_indices = @transform_2, window_bounds = array<i64: 152, 128>}, {pipeline_mode = #tpu.pipeline_mode<synchronous>, transform_indices = @transform_3, window_bounds = array<i64: 2, 128>}, {transform_indices = @transform_4, window_bounds = array<i64: 1, 2, 128>}, {pipeline_mode = #tpu.pipeline_mode<synchronous>, transform_indices = @transform_5, window_bounds = array<i64: 2, 128>}]} {
    %c0_i32 = arith.constant 0 : i32
    %0 = arith.cmpi eq, %arg0, %c0_i32 : i32
    %1 = arith.extui %0 : i1 to i32
    %c0_i32_0 = arith.constant 0 : i32
    %2 = arith.cmpi ne, %1, %c0_i32_0 : i32
    scf.if %2 {
      %c0_33 = arith.constant 0 : index
      %c0_34 = arith.constant 0 : index
      %91 = vector.load %arg5[%c0_33, %c0_34] : memref<2x128xf32, #tpu.memory_space<vmem>>, vector<2x128xf32>
      %c0_35 = arith.constant 0 : index
      %c0_36 = arith.constant 0 : index
      %92 = vector.load %arg7[%c0_35, %c0_36] : memref<2x128xf32, #tpu.memory_space<vmem>>, vector<2x128xf32>
      tpu.vector_store %arg7[%c0_35, %c0_36], %91 {strides = array<i32>} : memref<2x128xf32, #tpu.memory_space<vmem>>, vector<2x128xf32>,
    } else {
    }
    %c0 = arith.constant 0 : index
    %c0_1 = arith.constant 0 : index
    %3 = vector.load %arg7[%c0, %c0_1] : memref<2x128xf32, #tpu.memory_space<vmem>>, vector<2x128xf32>
    %4 = vector.extract_strided_slice %3 {offsets = [0, 0], sizes = [2, 32], strides = [1, 1]} : vector<2x128xf32> to vector<2x32xf32>
    %5 = vector.extract_strided_slice %3 {offsets = [0, 32], sizes = [2, 32], strides = [1, 1]} : vector<2x128xf32> to vector<2x32xf32>
    %c0_2 = arith.constant 0 : index
    %c0_3 = arith.constant 0 : index
    %6 = vector.load %arg4[%c0_2, %c0_3] : memref<152x128xf32, #tpu.memory_space<vmem>>, vector<64x128xf32>
    %c64 = arith.constant 64 : index
    %c0_4 = arith.constant 0 : index
    %7 = vector.load %arg4[%c64, %c0_4] : memref<152x128xf32, #tpu.memory_space<vmem>>, vector<16x128xf32>
    %c80 = arith.constant 80 : index
    %c0_5 = arith.constant 0 : index
    %8 = vector.load %arg4[%c80, %c0_5] : memref<152x128xf32, #tpu.memory_space<vmem>>, vector<32x128xf32>
    %c112 = arith.constant 112 : index
    %c0_6 = arith.constant 0 : index
    %9 = vector.load %arg4[%c112, %c0_6] : memref<152x128xf32, #tpu.memory_space<vmem>>, vector<32x128xf32>
    %c144 = arith.constant 144 : index
    %c0_7 = arith.constant 0 : index
    %10 = vector.load %arg4[%c144, %c0_7] : memref<152x128xf32, #tpu.memory_space<vmem>>, vector<1x128xf32>
    %c145 = arith.constant 145 : index
    %c0_8 = arith.constant 0 : index
    %11 = vector.load %arg4[%c145, %c0_8] : memref<152x128xf32, #tpu.memory_space<vmem>>, vector<1x128xf32>
    %c146 = arith.constant 146 : index
    %c0_9 = arith.constant 0 : index
    %12 = vector.load %arg4[%c146, %c0_9] : memref<152x128xf32, #tpu.memory_space<vmem>>, vector<1x128xf32>
    %13 = vector.extract_strided_slice %12 {offsets = [0, 0], sizes = [1, 32], strides = [1, 1]} : vector<1x128xf32> to vector<1x32xf32>
    %14 = vector.extract_strided_slice %12 {offsets = [0, 32], sizes = [1, 64], strides = [1, 1]} : vector<1x128xf32> to vector<1x64xf32>
    %15 = vector.extract_strided_slice %12 {offsets = [0, 96], sizes = [1, 1], strides = [1, 1]} : vector<1x128xf32> to vector<1x1xf32>
    %16 = arith.index_cast %arg0 : i32 to index
    %c0_10 = arith.constant 0 : index
    %17 = memref.load %arg1[%16, %c0_10] : memref<8x2xi32, #tpu.memory_space<smem>>
    %18 = tpu.iota {dimensions = array<i32: 1>} : vector<1x64xi32>
    %19 = vector.broadcast %17 : i32 to vector<1x64xi32>
    %20 = arith.cmpi eq, %18, %19 : vector<1x64xi32>
    %21 = arith.extui %20 : vector<1x64xi1> to vector<1x64xi32>
    %22 = arith.sitofp %21 : vector<1x64xi32> to vector<1x64xf32>
    %23 = arith.index_cast %arg0 : i32 to index
    %c1 = arith.constant 1 : index
    %24 = memref.load %arg1[%23, %c1] : memref<8x2xi32, #tpu.memory_space<smem>>
    %25 = tpu.iota {dimensions = array<i32: 1>} : vector<1x64xi32>
    %26 = vector.broadcast %24 : i32 to vector<1x64xi32>
    %27 = arith.cmpi eq, %25, %26 : vector<1x64xi32>
    %28 = arith.extui %27 : vector<1x64xi1> to vector<1x64xi32>
    %29 = arith.sitofp %28 : vector<1x64xi32> to vector<1x64xf32>
    %30 = tpu.concatenate %22, %29 in 0 : vector<1x64xf32>, vector<1x64xf32> -> vector<2x64xf32>
    %c0_11 = arith.constant 0 : index
    %c0_12 = arith.constant 0 : index
    %31 = vector.load %arg2[%c0_11, %c0_12] : memref<64x16xf32, #tpu.memory_space<vmem>>, vector<64x16xf32>
    %cst = arith.constant dense<0.000000e+00> : vector<2x16xf32>
    %32 = tpu.matmul %30, %31, %cst {dimension_numbers = #tpu.dot_dimension_numbers<[1], [0], [0], [1], [0, 0, 1, 1], [], []>} : vector<2x64xf32>, vector<64x16xf32>, vector<2x16xf32> -> vector<2x16xf32>
    %c0_13 = arith.constant 0 : index
    %c0_14 = arith.constant 0 : index
    %c0_15 = arith.constant 0 : index
    %33 = vector.load %arg3[%c0_13, %c0_14, %c0_15] : memref<2x8x64xf32, #tpu.memory_space<vmem>>, vector<2x8x64xf32>
    %34 = vector.broadcast %13 : vector<1x32xf32> to vector<2x32xf32>
    %35 = arith.mulf %4, %34 : vector<2x32xf32>
    %cst_16 = arith.constant dense<0.000000e+00> : vector<2xf32>
    %36 = vector.multi_reduction <add>, %35, %cst_16 [1] : vector<2x32xf32> to vector<2xf32>
    %37 = vector.shape_cast %36 : vector<2xf32> to vector<2x1xf32>
    %38 = vector.shape_cast %14 : vector<1x64xf32> to vector<1x1x64xf32>
    %39 = vector.broadcast %38 : vector<1x1x64xf32> to vector<2x8x64xf32>
    %40 = arith.mulf %33, %39 : vector<2x8x64xf32>
    %cst_17 = arith.constant dense<0.000000e+00> : vector<2x8xf32>
    %41 = vector.multi_reduction <add>, %40, %cst_17 [2] : vector<2x8x64xf32> to vector<2x8xf32>
    %42 = vector.broadcast %37 : vector<2x1xf32> to vector<2x8xf32>
    %43 = arith.addf %41, %42 : vector<2x8xf32>
    %44 = vector.broadcast %15 : vector<1x1xf32> to vector<2x8xf32>
    %45 = arith.addf %43, %44 : vector<2x8xf32>
    %cst_18 = arith.constant 0.000000e+00 : f32
    %46 = vector.broadcast %cst_18 : f32 to vector<2x8xf32>
    %47 = arith.maximumf %45, %46 : vector<2x8xf32>
    %cst_19 = arith.constant dense<0xFF800000> : vector<2xf32>
    %48 = vector.multi_reduction <maximumf>, %47, %cst_19 [1] : vector<2x8xf32> to vector<2xf32>
    %49 = vector.shape_cast %48 : vector<2xf32> to vector<2x1xf32>
    %50 = vector.broadcast %49 : vector<2x1xf32> to vector<2x8xf32>
    %51 = arith.subf %47, %50 : vector<2x8xf32>
    %52 = math.exp %51 : vector<2x8xf32>
    %cst_20 = arith.constant dense<0.000000e+00> : vector<2xf32>
    %53 = vector.multi_reduction <add>, %52, %cst_20 [1] : vector<2x8xf32> to vector<2xf32>
    %54 = vector.shape_cast %53 : vector<2xf32> to vector<2x1xf32>
    %55 = vector.broadcast %54 : vector<2x1xf32> to vector<2x8xf32>
    %56 = arith.divf %52, %55 : vector<2x8xf32>
    %57 = vector.shape_cast %56 : vector<2x8xf32> to vector<2x8x1xf32>
    %58 = vector.broadcast %57 : vector<2x8x1xf32> to vector<2x8x64xf32>
    %59 = arith.mulf %58, %33 : vector<2x8x64xf32>
    %cst_21 = arith.constant dense<0.000000e+00> : vector<2x64xf32>
    %60 = vector.multi_reduction <add>, %59, %cst_21 [1] : vector<2x8x64xf32> to vector<2x64xf32>
    %cst_22 = arith.constant dense<0.000000e+00> : vector<2x128xf32>
    %61 = tpu.matmul %60, %6, %cst_22 {dimension_numbers = #tpu.dot_dimension_numbers<[1], [0], [0], [1], [0, 0, 1, 1], [], []>} : vector<2x64xf32>, vector<64x128xf32>, vector<2x128xf32> -> vector<2x128xf32>
    %cst_23 = arith.constant dense<0.000000e+00> : vector<2x128xf32>
    %62 = tpu.matmul %32, %7, %cst_23 {dimension_numbers = #tpu.dot_dimension_numbers<[1], [0], [0], [1], [0, 0, 1, 1], [], []>} : vector<2x16xf32>, vector<16x128xf32>, vector<2x128xf32> -> vector<2x128xf32>
    %63 = arith.addf %61, %62 : vector<2x128xf32>
    %cst_24 = arith.constant dense<0.000000e+00> : vector<2x128xf32>
    %64 = tpu.matmul %4, %8, %cst_24 {dimension_numbers = #tpu.dot_dimension_numbers<[1], [0], [0], [1], [0, 0, 1, 1], [], []>} : vector<2x32xf32>, vector<32x128xf32>, vector<2x128xf32> -> vector<2x128xf32>
    %65 = arith.addf %63, %64 : vector<2x128xf32>
    %66 = vector.broadcast %10 : vector<1x128xf32> to vector<2x128xf32>
    %67 = arith.addf %65, %66 : vector<2x128xf32>
    %68 = arith.negf %67 : vector<2x128xf32>
    %69 = math.exp %68 : vector<2x128xf32>
    %cst_25 = arith.constant 1.000000e+00 : f32
    %70 = vector.broadcast %cst_25 : f32 to vector<2x128xf32>
    %71 = arith.addf %70, %69 : vector<2x128xf32>
    %72 = arith.divf %70, %71 : vector<2x128xf32>
    %73 = math.tanh %67 : vector<2x128xf32>
    %74 = vector.extract_strided_slice %72 {offsets = [0, 0], sizes = [2, 32], strides = [1, 1]} : vector<2x128xf32> to vector<2x32xf32>
    %75 = vector.extract_strided_slice %72 {offsets = [0, 32], sizes = [2, 32], strides = [1, 1]} : vector<2x128xf32> to vector<2x32xf32>
    %76 = vector.extract_strided_slice %73 {offsets = [0, 64], sizes = [2, 32], strides = [1, 1]} : vector<2x128xf32> to vector<2x32xf32>
    %77 = vector.extract_strided_slice %72 {offsets = [0, 96], sizes = [2, 32], strides = [1, 1]} : vector<2x128xf32> to vector<2x32xf32>
    %78 = arith.mulf %75, %5 : vector<2x32xf32>
    %79 = arith.mulf %74, %76 : vector<2x32xf32>
    %80 = arith.addf %78, %79 : vector<2x32xf32>
    %81 = math.tanh %80 : vector<2x32xf32>
    %82 = arith.mulf %77, %81 : vector<2x32xf32>
    %c0_26 = arith.constant 0 : index
    %c0_27 = arith.constant 0 : index
    %83 = vector.load %arg7[%c0_26, %c0_27] : memref<2x128xf32, #tpu.memory_space<vmem>>, vector<2x32xf32>
    tpu.vector_store %arg7[%c0_26, %c0_27], %82 {strides = array<i32>} : memref<2x128xf32, #tpu.memory_space<vmem>>, vector<2x32xf32>,
    %c0_28 = arith.constant 0 : index
    %c32 = arith.constant 32 : index
    %84 = vector.load %arg7[%c0_28, %c32] : memref<2x128xf32, #tpu.memory_space<vmem>>, vector<2x32xf32>
    tpu.vector_store %arg7[%c0_28, %c32], %80 {strides = array<i32>} : memref<2x128xf32, #tpu.memory_space<vmem>>, vector<2x32xf32>,
    %cst_29 = arith.constant dense<0.000000e+00> : vector<2x128xf32>
    %85 = tpu.matmul %82, %9, %cst_29 {dimension_numbers = #tpu.dot_dimension_numbers<[1], [0], [0], [1], [0, 0, 1, 1], [], []>} : vector<2x32xf32>, vector<32x128xf32>, vector<2x128xf32> -> vector<2x128xf32>
    %86 = vector.broadcast %11 : vector<1x128xf32> to vector<2x128xf32>
    %87 = arith.addf %85, %86 : vector<2x128xf32>
    %c0_30 = arith.constant 0 : index
    %c0_31 = arith.constant 0 : index
    %c0_32 = arith.constant 0 : index
    %88 = vector.load %arg6[%c0_30, %c0_31, %c0_32] : memref<1x2x128xf32, #tpu.memory_space<vmem>>, vector<1x2x128xf32>
    %89 = vector.shape_cast %88 : vector<1x2x128xf32> to vector<2x128xf32>
    %90 = vector.shape_cast %87 : vector<2x128xf32> to vector<1x2x128xf32>
    tpu.vector_store %arg6[%c0_30, %c0_31, %c0_32], %90 {strides = array<i32>} : memref<1x2x128xf32, #tpu.memory_space<vmem>>, vector<1x2x128xf32>,
    return
  }
  func.func @transform_0(%arg0: i32, %arg1: memref<8x2xi32, #tpu.memory_space<smem>>) -> (i32, i32) {
    %c0_i32 = arith.constant 0 : i32
    %c0_i32_0 = arith.constant 0 : i32
    %c0_i32_1 = arith.constant 0 : i32
    return %c0_i32, %c0_i32_0 : i32, i32
  }
  func.func @transform_1(%arg0: i32, %arg1: memref<8x2xi32, #tpu.memory_space<smem>>) -> (i32, i32, i32) {
    %c0_i32 = arith.constant 0 : i32
    %c0_i32_0 = arith.constant 0 : i32
    %c0_i32_1 = arith.constant 0 : i32
    %c0_i32_2 = arith.constant 0 : i32
    return %c0_i32, %c0_i32_0, %c0_i32_1 : i32, i32, i32
  }
  func.func @transform_2(%arg0: i32, %arg1: memref<8x2xi32, #tpu.memory_space<smem>>) -> (i32, i32) {
    %c0_i32 = arith.constant 0 : i32
    %c0_i32_0 = arith.constant 0 : i32
    %c0_i32_1 = arith.constant 0 : i32
    return %c0_i32, %c0_i32_0 : i32, i32
  }
  func.func @transform_3(%arg0: i32, %arg1: memref<8x2xi32, #tpu.memory_space<smem>>) -> (i32, i32) {
    %c0_i32 = arith.constant 0 : i32
    %c0_i32_0 = arith.constant 0 : i32
    %c0_i32_1 = arith.constant 0 : i32
    return %c0_i32, %c0_i32_0 : i32, i32
  }
  func.func @transform_4(%arg0: i32, %arg1: memref<8x2xi32, #tpu.memory_space<smem>>) -> (i32, i32, i32) {
    %c0_i32 = arith.constant 0 : i32
    %c0_i32_0 = arith.constant 0 : i32
    %c0_i32_1 = arith.constant 0 : i32
    return %arg0, %c0_i32, %c0_i32_0 : i32, i32, i32
  }
  func.func @transform_5(%arg0: i32, %arg1: memref<8x2xi32, #tpu.memory_space<smem>>) -> (i32, i32) {
    %c0_i32 = arith.constant 0 : i32
    %c0_i32_0 = arith.constant 0 : i32
    %c0_i32_1 = arith.constant 0 : i32
    return %c0_i32, %c0_i32_0 : i32, i32
  }
}

</mosaic_0001>

<llo_original>
// kernel: tpu_custom_call.1
$region0: #{tpu_custom_call.1}
  #allocation0 [shape = 'u32[]', space=smem, size = 0x4, offset = 0x4, fixed_abs, tag = 'smem constant byte address 0x4 - core index']
  #allocation1 [shape = 'u32[144,128]{1,0:T(1,128)}', space=vmem, size = 0x12000, scoped, tag = 'internal scratch']
  #allocation2 [shape = 's32[1]{0}', space=sflag, size = 0x4, scoped, tag = 'scoped memory for tpu_custom_call.1']
  #allocation3 [shape = 'u8[4096]{0}', space=smem, size = 0x1000, scoped, tag = 'prefetched SMEM operand 0']
  %s0 = inlined_call_operand.vmem [shape: s32[8,2], index: 0, kind: input, shape index: {}]
  %s1 = inlined_call_operand.vmem [shape: f32[64,16], index: 1, kind: input, shape index: {}]
  %s2 = inlined_call_operand.vmem [shape: f32[2,8,64], index: 2, kind: input, shape index: {}]
  %s3 = inlined_call_operand.hbm [shape: f32[152,128], index: 3, kind: input, shape index: {}]
  %s4 = inlined_call_operand.vmem [shape: f32[2,128], index: 4, kind: input, shape index: {}]
  %s5 = inlined_call_operand.hbm [shape: f32[8,2,128], index: 5, kind: output, shape index: {0}]
  %s6 = inlined_call_operand.hbm [shape: f32[2,128], index: 6, kind: output, shape index: {1}]
  %7 = xla_tuple %s5, %s6
  %s8 = sld [smem:[#allocation0]]
  $region65: #{tpu_custom_call.1} parent=0
    _
  %s10 = ssub.s32 1, %s8
  %s11 = scalar_select 0, %s10, %s8
  %s12 = sshll.u32 %s0, 4
  %s13 = int_to_ptr.vmem [resolvable:$true] %s12
  %15 = dma.vmem_to_smem %s13, 128, [#allocation3], [#allocation2]
  %16 = dma.done [#allocation2], 128
  %17 = sfence
  $region1: #{tpu_custom_call.1} parent=0
    #allocation4 [shape = 'u8[77824]{0}', space=vmem, size = 0x13000, scoped, tag = 'input window, operand 3, single buffered']
    #allocation5 [shape = 's32[2]{0}', space=sflag, size = 0x8, scoped, tag = 'scoped memory for tpu_custom_call.1']
    #allocation6 [shape = 's32[2]{0}', space=sflag, size = 0x8, scoped, tag = 'scoped memory for tpu_custom_call.1']
    #allocation7 [shape = 'u8[2048]{0}', space=vmem, size = 0x800, scoped, tag = 'output window, operand 0']
    #allocation8 [shape = 'u8[1024]{0}', space=vmem, size = 0x400, scoped, tag = 'output window, operand 1, single buffered']
    #allocation9 [shape = 's32[1]{0}', space=sflag, size = 0x4, scoped, tag = 'scoped memory for tpu_custom_call.1']
    %18 = vsyncpa [#allocation5], 0
    %19 = vsyncpa [#allocation6], 0
    %s20 = scalar_lea.sflag [#allocation6], 1
    %21 = vsyncpa %s20, 0
    %22 = vsyncpa [#allocation9], 0
    loop: start=0, step=1, limit=10
    $region2: #{tpu_custom_call.1} parent=1 // loop_pre_header
      _
    $region3: #{tpu_custom_call.1} parent=1 // loop_header
      %s24 = sphi 0, %s28
      %p25 = scmp.ge.s32.totalorder %s24, 10
      %s32 = sphi 0, %s32
      %s34 = sphi 0, %s32
      %s35 = sphi 0, %s34
      %s49 = sphi 0, %s35
      %s53 = sphi 0, %s53
      %s55 = sphi 0, %s53
      %s56 = sphi 0, %s55
      %s70 = sphi 0, %s56
      %s74 = sphi 0, %s74
      %s76 = sphi 0, %s74
      %s77 = sphi 0, %s76
      %s91 = sphi 0, %s77
      %s95 = sphi 0, %s95
      %s97 = sphi 0, %s95
      %s98 = sphi 0, %s97
      %s112 = sphi 0, %s98
      %s118 = sphi 0, %s120
      %s121 = sphi 0, %s118
      %s122 = sphi 0, %s121
      %s138 = sphi 0, %s122
      %s142 = sphi 0, %s142
      %s144 = sphi 0, %s142
      %s145 = sphi 0, %s144
      %s159 = sphi 0, %s145
    $region4: #{tpu_custom_call.1} parent=1 // loop_header_branch
      %27 = sbr.rel (%p25) target = $region8
    $region5: #{tpu_custom_call.1} parent=1 // loop_body
      %s29 = ssub.s32 %s24, 1
      %s30 = ssub.s32 %s24, 2
      %s31 = sadd.s32 %s24, 1
      %s33 = sadd.s32 %s32, 1
      %p36 = scmp.eq.s32.totalorder %s24, 7
      %p37 = scmp.ne.s32.totalorder %s32, %s34
      %p38 = scmp.eq.s32.totalorder %s24, 0
      %p39 = por %p37, %p38
      %p40 = scmp.ne.s32.totalorder %s32, %s34
      %p41 = scmp.eq.s32.totalorder %s29, 7
      %p42 = por %p40, %p41
      %p43 = scmp.ne.s32.totalorder %s34, %s35
      %p44 = scmp.eq.s32.totalorder %s29, 0
      %p45 = por %p43, %p44
      %p46 = scmp.ne.s32.totalorder %s34, %s35
      %p47 = scmp.eq.s32.totalorder %s30, 7
      %p48 = por %p46, %p47
      %p50 = scmp.ne.s32.totalorder %s35, %s49
      %p51 = scmp.eq.s32.totalorder %s30, 0
      %p52 = por %p50, %p51
      %s54 = sadd.s32 %s53, 1
      %p57 = scmp.eq.s32.totalorder %s24, 7
      %p58 = scmp.ne.s32.totalorder %s53, %s55
      %p59 = scmp.eq.s32.totalorder %s24, 0
      %p60 = por %p58, %p59
      %p61 = scmp.ne.s32.totalorder %s53, %s55
      %p62 = scmp.eq.s32.totalorder %s29, 7
      %p63 = por %p61, %p62
      %p64 = scmp.ne.s32.totalorder %s55, %s56
      %p65 = scmp.eq.s32.totalorder %s29, 0
      %p66 = por %p64, %p65
      %p67 = scmp.ne.s32.totalorder %s55, %s56
      %p68 = scmp.eq.s32.totalorder %s30, 7
      %p69 = por %p67, %p68
      %p71 = scmp.ne.s32.totalorder %s56, %s70
      %p72 = scmp.eq.s32.totalorder %s30, 0
      %p73 = por %p71, %p72
      %s75 = sadd.s32 %s74, 1
      %p78 = scmp.eq.s32.totalorder %s24, 7
      %p79 = scmp.ne.s32.totalorder %s74, %s76
      %p80 = scmp.eq.s32.totalorder %s24, 0
      %p81 = por %p79, %p80
      %p82 = scmp.ne.s32.totalorder %s74, %s76
      %p83 = scmp.eq.s32.totalorder %s29, 7
      %p84 = por %p82, %p83
      %p85 = scmp.ne.s32.totalorder %s76, %s77
      %p86 = scmp.eq.s32.totalorder %s29, 0
      %p87 = por %p85, %p86
      %p88 = scmp.ne.s32.totalorder %s76, %s77
      %p89 = scmp.eq.s32.totalorder %s30, 7
      %p90 = por %p88, %p89
      %p92 = scmp.ne.s32.totalorder %s77, %s91
      %p93 = scmp.eq.s32.totalorder %s30, 0
      %p94 = por %p92, %p93
      %s96 = sadd.s32 %s95, 1
      %p99 = scmp.eq.s32.totalorder %s24, 7
      %p100 = scmp.ne.s32.totalorder %s95, %s97
      %p101 = scmp.eq.s32.totalorder %s24, 0
      %p102 = por %p100, %p101
      %p103 = scmp.ne.s32.totalorder %s95, %s97
      %p104 = scmp.eq.s32.totalorder %s29, 7
      %p105 = por %p103, %p104
      %p106 = scmp.ne.s32.totalorder %s97, %s98
      %p107 = scmp.eq.s32.totalorder %s29, 0
      %p108 = por %p106, %p107
      %p109 = scmp.ne.s32.totalorder %s97, %s98
      %p110 = scmp.eq.s32.totalorder %s30, 7
      %p111 = por %p109, %p110
      %p113 = scmp.ne.s32.totalorder %s98, %s112
      %p114 = scmp.eq.s32.totalorder %s30, 0
      %p115 = por %p113, %p114
      %s116 = ssub.s32 %s24, %s31
      %p117 = scmp.eq.s32.totalorder %s116, 0
      %s119 = sadd.s32 %s118, 1
      %s120 = scalar_select %p117, %s118, %s119
      %p123 = pneg %p117
      %p124 = scmp.eq.s32.totalorder %s24, 7
      %p125 = por %p123, %p124
      %p126 = scmp.ne.s32.totalorder %s118, %s121
      %p127 = scmp.eq.s32.totalorder %s24, 0
      %p128 = por %p126, %p127
      %p129 = scmp.ne.s32.totalorder %s118, %s121
      %p130 = scmp.eq.s32.totalorder %s29, 7
      %p131 = por %p129, %p130
      %p132 = scmp.ne.s32.totalorder %s121, %s122
      %p133 = scmp.eq.s32.totalorder %s29, 0
      %p134 = por %p132, %p133
      %p135 = scmp.ne.s32.totalorder %s121, %s122
      %p136 = scmp.eq.s32.totalorder %s30, 7
      %p137 = por %p135, %p136
      %p139 = scmp.ne.s32.totalorder %s122, %s138
      %p140 = scmp.eq.s32.totalorder %s30, 0
      %p141 = por %p139, %p140
      %s143 = sadd.s32 %s142, 1
      %p146 = scmp.eq.s32.totalorder %s24, 7
      %p147 = scmp.ne.s32.totalorder %s142, %s144
      %p148 = scmp.eq.s32.totalorder %s24, 0
      %p149 = por %p147, %p148
      %p150 = scmp.ne.s32.totalorder %s142, %s144
      %p151 = scmp.eq.s32.totalorder %s29, 7
      %p152 = por %p150, %p151
      %p153 = scmp.ne.s32.totalorder %s144, %s145
      %p154 = scmp.eq.s32.totalorder %s29, 0
      %p155 = por %p153, %p154
      %p156 = scmp.ne.s32.totalorder %s144, %s145
      %p157 = scmp.eq.s32.totalorder %s30, 7
      %p158 = por %p156, %p157
      %p160 = scmp.ne.s32.totalorder %s145, %s159
      %p161 = scmp.eq.s32.totalorder %s30, 0
      %p162 = por %p160, %p161
      %p163 = scmp.le.s32.totalorder 1, %s24
      %p164 = scmp.lt.s32.totalorder %s24, 9
      %p165 = pnand %p163, %p164
      %p166 = pneg %p165
      // Predicated region
      $region9: #{tpu_custom_call.1} parent=5 // pred_check
        _
      $region10: #{tpu_custom_call.1} parent=5 // pred_check_branch
        %168 = sbr.rel (%p165) target = $region12
      $region11: #{tpu_custom_call.1} parent=5 // pred_region
        %s169 = ssub.s32 %s24, 1
        // Predicated region
        $region13: #{tpu_custom_call.1} parent=11 // pred_check
          %p170 = pneg %p45
        $region14: #{tpu_custom_call.1} parent=11 // pred_check_branch
          %172 = sbr.rel (%p170) target = $region16
        $region15: #{tpu_custom_call.1} parent=11 // pred_region
          _
        $region16: #{tpu_custom_call.1} parent=11 // pred_fallthru
          _
        // Predicated region
        $region17: #{tpu_custom_call.1} parent=11 // pred_check
          %p173 = pneg %p66
        $region18: #{tpu_custom_call.1} parent=11 // pred_check_branch
          %175 = sbr.rel (%p173) target = $region20
        $region19: #{tpu_custom_call.1} parent=11 // pred_region
          _
        $region20: #{tpu_custom_call.1} parent=11 // pred_fallthru
          _
        // Predicated region
        $region21: #{tpu_custom_call.1} parent=11 // pred_check
          %p176 = pneg %p87
        $region22: #{tpu_custom_call.1} parent=11 // pred_check_branch
          %178 = sbr.rel (%p176) target = $region24
        $region23: #{tpu_custom_call.1} parent=11 // pred_region
          %s180 = ssub.s32 2432, 2432
          %181 = vsyncadd [#allocation5], %s180
          %s182 = sshll.u32 [#allocation4], 4
          %s183 = int_to_ptr.vmem [resolvable:$true] %s182
          %188 = dma.hbm_to_vmem [thread:$0]  %s3, 2432, %s183, [#allocation5], 128, 128, 8
        $region24: #{tpu_custom_call.1} parent=11 // pred_fallthru
          _
        // Predicated region
        $region25: #{tpu_custom_call.1} parent=11 // pred_check
          %p189 = pneg %p108
        $region26: #{tpu_custom_call.1} parent=11 // pred_check_branch
          %191 = sbr.rel (%p189) target = $region28
        $region27: #{tpu_custom_call.1} parent=11 // pred_region
          _
        $region28: #{tpu_custom_call.1} parent=11 // pred_fallthru
          _
      $region12: #{tpu_custom_call.1} parent=5 // pred_fallthru
        _
      %p192 = scmp.lt.s32.totalorder %s24, 8
      // Predicated region
      $region29: #{tpu_custom_call.1} parent=5 // pred_check
        %p193 = pneg %p192
      $region30: #{tpu_custom_call.1} parent=5 // pred_check_branch
        %195 = sbr.rel (%p193) target = $region32
      $region31: #{tpu_custom_call.1} parent=5 // pred_region
        _
      $region32: #{tpu_custom_call.1} parent=5 // pred_fallthru
        _
      %p196 = scmp.le.s32.totalorder 1, %s24
      %p197 = scmp.lt.s32.totalorder %s24, 9
      %p198 = pnand %p196, %p197
      %p199 = pneg %p198
      // Predicated region
      $region33: #{tpu_custom_call.1} parent=5 // pred_check
        _
      $region34: #{tpu_custom_call.1} parent=5 // pred_check_branch
        %201 = sbr.rel (%p198) target = $region36
      $region35: #{tpu_custom_call.1} parent=5 // pred_region
        %s202 = ssub.s32 %s24, 1
        // Predicated region
        $region37: #{tpu_custom_call.1} parent=35 // pred_check
          %p203 = pneg %p87
        $region38: #{tpu_custom_call.1} parent=35 // pred_check_branch
          %205 = sbr.rel (%p203) target = $region40
        $region39: #{tpu_custom_call.1} parent=35 // pred_region
          %206 = dma.done [#allocation5], 2432
        $region40: #{tpu_custom_call.1} parent=35 // pred_fallthru
          _
        %p207 = pneg %p45
        %p208 = pneg %p42
        %p209 = pneg %p66
        %p210 = pneg %p63
        %p211 = pneg %p87
        %p212 = pneg %p84
        %p213 = pneg %p108
        %p214 = pneg %p105
        %p215 = pneg %p134
        %p216 = pneg %p131
        %s217 = sand.u32 %s121, 1
        %s218 = scalar_lea.sflag [#allocation6], %s217
        %s219 = sand.u32 %s121, 1
        %s220 = smul.addr %s219, 2
        %s221 = scalar_lea.vmem [#allocation7], %s220
        %p222 = pneg %p155
        %p223 = pneg %p152
        %p224 = scmp.eq.s32.totalorder %s29, 0
        // Predicated region
        $region41: #{tpu_custom_call.1} parent=35 // pred_check
          %p225 = pneg %p224
        $region42: #{tpu_custom_call.1} parent=35 // pred_check_branch
          %227 = sbr.rel (%p225) target = $region44
        $region43: #{tpu_custom_call.1} parent=35 // pred_region
          %v228 = vld [vmem:[%s4] sm:$0x3]
          %229 = vst [vmem:[#allocation8] sm:$0x3] %v228
        $region44: #{tpu_custom_call.1} parent=35 // pred_fallthru
          _
        %v230 = vld [vmem:[#allocation8] sm:$0x3]
        %v231 = vld [vmem:[#allocation4] sm:$0xff]
        %v232 = vld [vmem:[#allocation4 + $0x8] sm:$0xff]
        %v233 = vld [vmem:[#allocation4 + $0x10] sm:$0xff]
        %v234 = vld [vmem:[#allocation4 + $0x18] sm:$0xff]
        %v235 = vld [vmem:[#allocation4 + $0x20] sm:$0xff]
        %v236 = vld [vmem:[#allocation4 + $0x28] sm:$0xff]
        %v237 = vld [vmem:[#allocation4 + $0x30] sm:$0xff]
        %v238 = vld [vmem:[#allocation4 + $0x38] sm:$0xff]
        %v239 = vld [vmem:[#allocation4 + $0x40] sm:$0xff]
        %v240 = vld [vmem:[#allocation4 + $0x48] sm:$0xff]
        %v241 = vld [vmem:[#allocation4 + $0x50] sm:$0xff]
        %v242 = vld [vmem:[#allocation4 + $0x58] sm:$0xff]
        %v243 = vld [vmem:[#allocation4 + $0x60] sm:$0xff]
        %v244 = vld [vmem:[#allocation4 + $0x68] sm:$0xff]
        %v245 = vld [vmem:[#allocation4 + $0x70] sm:$0xff]
        %v246 = vld [vmem:[#allocation4 + $0x78] sm:$0xff]
        %v247 = vld [vmem:[#allocation4 + $0x80] sm:$0xff]
        %v248 = vld [vmem:[#allocation4 + $0x88] sm:$0xff]
        %v249 = vld [vmem:[#allocation4 + $0x90] sm:$0x1]
        %v250 = vld [vmem:[#allocation4 + $0x91] sm:$0x1]
        %v251 = vld [vmem:[#allocation4 + $0x92] sm:$0x1]
        %s252 = smul.u32 %s29, 128
        %s253 = sld [smem:[#allocation3 + %s252]]
        %v254 = vlaneseq
        %v255 = vand.u32 %v254, 127
        %v256 = vstv %s253
        %vm257 = vcmp.eq.s32.totalorder %v255, %v256
        %v258 = vsel %vm257, 1, 0
        %v259 = vcvt.s32.f32 %v258
        %s260 = sadd.s32 %s252, 1
        %s261 = sld [smem:[#allocation3 + %s260]]
        %v262 = vstv %s261
        %vm263 = vcmp.eq.s32.totalorder %v255, %v262
        %v264 = vsel %vm263, 1, 0
        %v265 = vcvt.s32.f32 %v264
        %vm266 = vcmask 1040384
        %v267 = vsel %vm266, %v259, %v265
        %v268 = vld [vmem:[%s1] sm:$0xff]
        %v269 = vld [vmem:[%s1 + $0x8] sm:$0xff]
        %v270 = vld [vmem:[%s1 + $0x10] sm:$0xff]
        %v271 = vld [vmem:[%s1 + $0x18] sm:$0xff]
        %v272 = vld [vmem:[%s1 + $0x20] sm:$0xff]
        %v273 = vld [vmem:[%s1 + $0x28] sm:$0xff]
        %v274 = vld [vmem:[%s1 + $0x30] sm:$0xff]
        %v275 = vld [vmem:[%s1 + $0x38] sm:$0xff]
        %vm276 = vcmask 523264
        %v278 = vsel %vm276, %v267, 0
        %280 = vmatprep.subr.mxu0 0.0
        %281 = vmatpush1.msra.mxu0 %v268
        %282 = vmatprep.subr.mxu0 0.0
        %283 = vmatpush1.msra.mxu0 %v269
        %284 = vmatprep.subr.mxu0 0.0
        %285 = vmatpush1.msra.mxu0 %v270
        %286 = vmatprep.subr.mxu0 0.0
        %287 = vmatpush1.msra.mxu0 %v271
        %288 = vmatprep.subr.mxu0 0.0
        %289 = vmatpush1.msra.mxu0 %v272
        %290 = vmatprep.subr.mxu0 0.0
        %291 = vmatpush1.msra.mxu0 %v273
        %292 = vmatprep.subr.mxu0 0.0
        %293 = vmatpush1.msra.mxu0 %v274
        %294 = vmatprep.subr.mxu0 0.0
        %295 = vmatpush1.msra.mxu0 %v275
        %296 = vmatprep.subr.mxu0 0.0
        %297 = vmatpush1.msra.mxu0 0.0
        %298 = vmatprep.subr.mxu0 0.0
        %299 = vmatpush1.msra.mxu0 0.0
        %300 = vmatprep.subr.mxu0 0.0
        %301 = vmatpush1.msra.mxu0 0.0
        %302 = vmatprep.subr.mxu0 0.0
        %303 = vmatpush1.msra.mxu0 0.0
        %304 = vmatprep.subr.mxu0 0.0
        %305 = vmatpush1.msra.mxu0 0.0
        %306 = vmatprep.subr.mxu0 0.0
        %307 = vmatpush1.msra.mxu0 0.0
        %308 = vmatprep.subr.mxu0 0.0
        %309 = vmatpush1.msra.mxu0 0.0
        %310 = vmatprep.subr.mxu0 0.0
        %311 = vmatpush1.msra.mxu0 0.0
        %312 = vmatprep.subr.mxu0 0.0
        %313 = vmatpush1.msra.mxu0 0.0
        %314 = vmatprep.subr.mxu0 0.0
        %315 = vmatpush1.msra.mxu0 0.0
        %316 = vmatprep.subr.mxu0 0.0
        %317 = vmatpush1.msra.mxu0 0.0
        %318 = vmatprep.subr.mxu0 0.0
        %319 = vmatpush1.msra.mxu0 0.0
        %320 = vmatprep.subr.mxu0 0.0
        %321 = vmatpush1.msra.mxu0 0.0
        %322 = vmatprep.subr.mxu0 0.0
        %323 = vmatpush1.msra.mxu0 0.0
        %324 = vmatprep.subr.mxu0 0.0
        %325 = vmatpush1.msra.mxu0 0.0
        %326 = vmatprep.subr.mxu0 0.0
        %327 = vmatpush1.msra.mxu0 0.0
        %328 = vmatprep.subr.mxu0 0.0
        %329 = vmatpush1.msra.mxu0 0.0
        %330 = vmatprep.subr.mxu0 0.0
        %331 = vmatpush1.msra.mxu0 0.0
        %332 = vmatprep.subr.mxu0 0.0
        %333 = vmatpush1.msra.mxu0 0.0
        %334 = vmatprep.subr.mxu0 0.0
        %335 = vmatpush1.msra.mxu0 0.0
        %336 = vmatprep.subr.mxu0 0.0
        %337 = vmatpush1.msra.mxu0 0.0
        %338 = vmatprep.subr.mxu0 0.0
        %339 = vmatpush1.msra.mxu0 0.0
        %340 = vmatprep.subr.mxu0 0.0
        %341 = vmatpush1.msra.mxu0 0.0
        %342 = vmatprep.subr.mxu0 0.0
        %343 = vmatpush1.msra.mxu0 0.0
        %344 = vmatprep.mubr.f32.mxu0 0.0
        %345 = vmatmul.mubr.f32.gmra.mrb[0].mxu0 %v278
        %v346 = vpop.f32.mrb[0].mxu0
        %v347 = vadd.f32 0.0, %v346
        %v348 = vpop.f32.mrb[0].mxu0
        %349 = vdwg.mxu0
        %v350 = vld [vmem:[%s2] sm:$0xff]
        %v351 = vld [vmem:[%s2 + $0x8] sm:$0xff]
        %v352 = vlaneseq
        %v353 = vshrl.u32 %v352, 7
        %v354 = vsub.s32 0, %v353
        %v355 = vrot.slane %v251, %v354
        %v356 = vmul.f32 %v230, %v355
        %vm357 = vcmask 254976
        %v358 = vsel %vm357, %v356, 0.0
        %359 = vadd.xlane.f32.xlu0 %v358
        %v360 = vpop.xlane.xlu0 %359
        %362 = vrot.lane.b32.xlu0 %v355, 96
        %v363 = vpop.permute.xlu0 %362
        %v365 = vmul.f32 %v350, %v363
        %v366 = vmul.f32 %v351, %v363
        %v367 = vsel %vm276, %v365, 0.0
        %368 = vadd.xlane.f32.xlu0 %v367
        %v369 = vpop.xlane.xlu0 %368
        %v370 = vsel %vm276, %v366, 0.0
        %371 = vadd.xlane.f32.xlu0 %v370
        %v372 = vpop.xlane.xlu0 %371
        %v374 = vlaneseq
        %v375 = vshrl.u32 %v374, 7
        %v376 = vsub.s32 0, %v375
        %v377 = vrot.slane %v360, %v376
        %v378 = vlaneseq
        %v379 = vshrl.u32 %v378, 7
        %v380 = vsub.s32 1, %v379
        %v381 = vrot.slane %v360, %v380
        %v384 = vadd.f32 %v369, %v377
        %v385 = vadd.f32 %v372, %v381
        %387 = vrot.lane.b32.xlu0 %v251, 32
        %v388 = vpop.permute.xlu0 %387
        %s389 = vtos %v388
        %v390 = vstv %s389
        %v392 = vadd.f32 %v384, %v390
        %v393 = vadd.f32 %v385, %v390
        %v394 = vmax.f32 %v392, 0.0
        %v395 = vmax.f32 %v393, 0.0
        %398 = vset.pattern.permute.xlu0 0
        %399 = vperm.xlu0 %398, %v394
        %v400 = vpop.permute.xlu0 %399
        %401 = vset.pattern.permute.xlu0 0
        %402 = vperm.xlu0 %401, %v395
        %v403 = vpop.permute.xlu0 %402
        %v404 = vlaneseq
        %v405 = vshrl.u32 %v404, 7
        %v406 = vsub.s32 %v255, %v405
        %v407 = vrot.slane %v400, %v406
        %v408 = vlaneseq
        %v409 = vshrl.u32 %v408, 7
        %v410 = vsub.s32 %v255, %v409
        %v411 = vrot.slane %v403, %v410
        %vm412 = vcmask 1041409
        %v413 = vsel %vm412, %v411, %v407
        %vm415 = vcmask 58368
        %v416 = vsel %vm415, %v413, -inf
        %417 = vmax.xlane.f32.xlu0 %v416
        %v418 = vpop.xlane.xlu0 %417
        %v420 = vlaneseq
        %v421 = vshrl.u32 %v420, 7
        %v422 = vsub.s32 0, %v421
        %v423 = vrot.slane %v418, %v422
        %v424 = vlaneseq
        %v425 = vshrl.u32 %v424, 7
        %v426 = vsub.s32 1, %v425
        %v427 = vrot.slane %v418, %v426
        %v430 = vsub.f32 %v394, %v423
        %v431 = vsub.f32 %v395, %v427
        %v432 = vmul.f32 %v430, 1.442695
        %v433 = vpow.pop %v432
        %v434 = vmul.f32 %v431, 1.442695
        %v435 = vpow.pop %v434
        %438 = vset.pattern.permute.xlu0 0
        %439 = vperm.xlu0 %438, %v433
        %v440 = vpop.permute.xlu0 %439
        %441 = vset.pattern.permute.xlu0 0
        %442 = vperm.xlu0 %441, %v435
        %v443 = vpop.permute.xlu0 %442
        %v444 = vlaneseq
        %v445 = vshrl.u32 %v444, 7
        %v446 = vsub.s32 %v255, %v445
        %v447 = vrot.slane %v440, %v446
        %v448 = vlaneseq
        %v449 = vshrl.u32 %v448, 7
        %v450 = vsub.s32 %v255, %v449
        %v451 = vrot.slane %v443, %v450
        %v452 = vsel %vm412, %v451, %v447
        %v454 = vsel %vm415, %v452, 0.0
        %455 = vadd.xlane.f32.xlu0 %v454
        %v456 = vpop.xlane.xlu0 %455
        %v458 = vlaneseq
        %v459 = vshrl.u32 %v458, 7
        %v460 = vsub.s32 0, %v459
        %v461 = vrot.slane %v456, %v460
        %v462 = vlaneseq
        %v463 = vshrl.u32 %v462, 7
        %v464 = vsub.s32 1, %v463
        %v465 = vrot.slane %v456, %v464
        %v468 = vrcp.pop %v461
        %v469 = vmul.f32 %v433, %v468
        %v470 = vrcp.pop %v465
        %v471 = vmul.f32 %v435, %v470
        %473 = vset.pattern.permute.xlu0 0
        %474 = vperm.xlu0 %473, %v469
        %v475 = vpop.permute.xlu0 %474
        %478 = vset.pattern.permute.xlu0 0
        %479 = vperm.xlu0 %478, %v471
        %v480 = vpop.permute.xlu0 %479
        %v482 = vmul.f32 %v475, %v350
        %v483 = vmul.f32 %v480, %v351
        %v484 = vsel %vm276, %v482, 0.0
        %v485 = vrot.slane %v484, 4
        %v486 = vadd.f32 %v484, %v485
        %v487 = vrot.slane %v486, 2
        %v488 = vadd.f32 %v486, %v487
        %v489 = vrot.slane %v488, 1
        %v490 = vadd.f32 %v488, %v489
        %v491 = vsel %vm276, %v483, 0.0
        %v492 = vrot.slane %v491, 4
        %v493 = vadd.f32 %v491, %v492
        %v494 = vrot.slane %v493, 2
        %v495 = vadd.f32 %v493, %v494
        %v496 = vrot.slane %v495, 1
        %v497 = vadd.f32 %v495, %v496
        %vm498 = vcmask 130048
        %v500 = vsel %vm498, %v347, 0
        %502 = vmatprep.subr.mxu0 0.0
        %503 = vmatpush1.msra.mxu0 %v239
        %504 = vmatprep.subr.mxu0 0.0
        %505 = vmatpush1.msra.mxu0 %v240
        %506 = vmatprep.subr.mxu0 0.0
        %507 = vmatpush1.msra.mxu0 0.0
        %508 = vmatprep.subr.mxu0 0.0
        %509 = vmatpush1.msra.mxu0 0.0
        %510 = vmatprep.subr.mxu0 0.0
        %511 = vmatpush1.msra.mxu0 0.0
        %512 = vmatprep.subr.mxu0 0.0
        %513 = vmatpush1.msra.mxu0 0.0
        %514 = vmatprep.subr.mxu0 0.0
        %515 = vmatpush1.msra.mxu0 0.0
        %516 = vmatprep.subr.mxu0 0.0
        %517 = vmatpush1.msra.mxu0 0.0
        %518 = vmatprep.subr.mxu0 0.0
        %519 = vmatpush1.msra.mxu0 0.0
        %520 = vmatprep.subr.mxu0 0.0
        %521 = vmatpush1.msra.mxu0 0.0
        %522 = vmatprep.subr.mxu0 0.0
        %523 = vmatpush1.msra.mxu0 0.0
        %524 = vmatprep.subr.mxu0 0.0
        %525 = vmatpush1.msra.mxu0 0.0
        %526 = vmatprep.subr.mxu0 0.0
        %527 = vmatpush1.msra.mxu0 0.0
        %528 = vmatprep.subr.mxu0 0.0
        %529 = vmatpush1.msra.mxu0 0.0
        %530 = vmatprep.subr.mxu0 0.0
        %531 = vmatpush1.msra.mxu0 0.0
        %532 = vmatprep.subr.mxu0 0.0
        %533 = vmatpush1.msra.mxu0 0.0
        %534 = vmatprep.subr.mxu0 0.0
        %535 = vmatpush1.msra.mxu0 0.0
        %536 = vmatprep.subr.mxu0 0.0
        %537 = vmatpush1.msra.mxu0 0.0
        %538 = vmatprep.subr.mxu0 0.0
        %539 = vmatpush1.msra.mxu0 0.0
        %540 = vmatprep.subr.mxu0 0.0
        %541 = vmatpush1.msra.mxu0 0.0
        %542 = vmatprep.subr.mxu0 0.0
        %543 = vmatpush1.msra.mxu0 0.0
        %544 = vmatprep.subr.mxu0 0.0
        %545 = vmatpush1.msra.mxu0 0.0
        %546 = vmatprep.subr.mxu0 0.0
        %547 = vmatpush1.msra.mxu0 0.0
        %548 = vmatprep.subr.mxu0 0.0
        %549 = vmatpush1.msra.mxu0 0.0
        %550 = vmatprep.subr.mxu0 0.0
        %551 = vmatpush1.msra.mxu0 0.0
        %552 = vmatprep.subr.mxu0 0.0
        %553 = vmatpush1.msra.mxu0 0.0
        %554 = vmatprep.subr.mxu0 0.0
        %555 = vmatpush1.msra.mxu0 0.0
        %556 = vmatprep.subr.mxu0 0.0
        %557 = vmatpush1.msra.mxu0 0.0
        %558 = vmatprep.subr.mxu0 0.0
        %559 = vmatpush1.msra.mxu0 0.0
        %560 = vmatprep.subr.mxu0 0.0
        %561 = vmatpush1.msra.mxu0 0.0
        %562 = vmatprep.subr.mxu0 0.0
        %563 = vmatpush1.msra.mxu0 0.0
        %564 = vmatprep.subr.mxu0 0.0
        %565 = vmatpush1.msra.mxu0 0.0
        %566 = vmatprep.mubr.f32.mxu0 0.0
        %567 = vmatmul.mubr.f32.gmra.mrb[0].mxu0 %v500
        %v568 = vpop.f32.mrb[0].mxu0
        %v569 = vadd.f32 0.0, %v568
        %v570 = vpop.f32.mrb[0].mxu0
        %571 = vdwg.mxu0
        %v574 = vsel %vm412, %v497, %v490
        %v575 = vsel %vm276, %v574, 0
        %577 = vmatprep.subr.mxu0 0.0
        %578 = vmatpush1.msra.mxu0 %v231
        %579 = vmatprep.subr.mxu0 0.0
        %580 = vmatpush1.msra.mxu0 %v232
        %581 = vmatprep.subr.mxu0 0.0
        %582 = vmatpush1.msra.mxu0 %v233
        %583 = vmatprep.subr.mxu0 0.0
        %584 = vmatpush1.msra.mxu0 %v234
        %585 = vmatprep.subr.mxu0 0.0
        %586 = vmatpush1.msra.mxu0 %v235
        %587 = vmatprep.subr.mxu0 0.0
        %588 = vmatpush1.msra.mxu0 %v236
        %589 = vmatprep.subr.mxu0 0.0
        %590 = vmatpush1.msra.mxu0 %v237
        %591 = vmatprep.subr.mxu0 0.0
        %592 = vmatpush1.msra.mxu0 %v238
        %593 = vmatprep.subr.mxu0 0.0
        %594 = vmatpush1.msra.mxu0 0.0
        %595 = vmatprep.subr.mxu0 0.0
        %596 = vmatpush1.msra.mxu0 0.0
        %597 = vmatprep.subr.mxu0 0.0
        %598 = vmatpush1.msra.mxu0 0.0
        %599 = vmatprep.subr.mxu0 0.0
        %600 = vmatpush1.msra.mxu0 0.0
        %601 = vmatprep.subr.mxu0 0.0
        %602 = vmatpush1.msra.mxu0 0.0
        %603 = vmatprep.subr.mxu0 0.0
        %604 = vmatpush1.msra.mxu0 0.0
        %605 = vmatprep.subr.mxu0 0.0
        %606 = vmatpush1.msra.mxu0 0.0
        %607 = vmatprep.subr.mxu0 0.0
        %608 = vmatpush1.msra.mxu0 0.0
        %609 = vmatprep.subr.mxu0 0.0
        %610 = vmatpush1.msra.mxu0 0.0
        %611 = vmatprep.subr.mxu0 0.0
        %612 = vmatpush1.msra.mxu0 0.0
        %613 = vmatprep.subr.mxu0 0.0
        %614 = vmatpush1.msra.mxu0 0.0
        %615 = vmatprep.subr.mxu0 0.0
        %616 = vmatpush1.msra.mxu0 0.0
        %617 = vmatprep.subr.mxu0 0.0
        %618 = vmatpush1.msra.mxu0 0.0
        %619 = vmatprep.subr.mxu0 0.0
        %620 = vmatpush1.msra.mxu0 0.0
        %621 = vmatprep.subr.mxu0 0.0
        %622 = vmatpush1.msra.mxu0 0.0
        %623 = vmatprep.subr.mxu0 0.0
        %624 = vmatpush1.msra.mxu0 0.0
        %625 = vmatprep.subr.mxu0 0.0
        %626 = vmatpush1.msra.mxu0 0.0
        %627 = vmatprep.subr.mxu0 0.0
        %628 = vmatpush1.msra.mxu0 0.0
        %629 = vmatprep.subr.mxu0 0.0
        %630 = vmatpush1.msra.mxu0 0.0
        %631 = vmatprep.subr.mxu0 0.0
        %632 = vmatpush1.msra.mxu0 0.0
        %633 = vmatprep.subr.mxu0 0.0
        %634 = vmatpush1.msra.mxu0 0.0
        %635 = vmatprep.subr.mxu0 0.0
        %636 = vmatpush1.msra.mxu0 0.0
        %637 = vmatprep.subr.mxu0 0.0
        %638 = vmatpush1.msra.mxu0 0.0
        %639 = vmatprep.subr.mxu0 0.0
        %640 = vmatpush1.msra.mxu0 0.0
        %641 = vmatprep.mubr.f32.mxu0 0.0
        %642 = vmatmul.mubr.f32.gmra.mrb[0].mxu0 %v575
        %v643 = vpop.f32.mrb[0].mxu0
        %v644 = vadd.f32 %v569, %v643
        %v645 = vpop.f32.mrb[0].mxu0
        %646 = vdwg.mxu0
        %vm647 = vcmask 261120
        %v649 = vsel %vm647, %v230, 0
        %651 = vmatprep.subr.mxu0 0.0
        %652 = vmatpush1.msra.mxu0 %v241
        %653 = vmatprep.subr.mxu0 0.0
        %654 = vmatpush1.msra.mxu0 %v242
        %655 = vmatprep.subr.mxu0 0.0
        %656 = vmatpush1.msra.mxu0 %v243
        %657 = vmatprep.subr.mxu0 0.0
        %658 = vmatpush1.msra.mxu0 %v244
        %659 = vmatprep.subr.mxu0 0.0
        %660 = vmatpush1.msra.mxu0 0.0
        %661 = vmatprep.subr.mxu0 0.0
        %662 = vmatpush1.msra.mxu0 0.0
        %663 = vmatprep.subr.mxu0 0.0
        %664 = vmatpush1.msra.mxu0 0.0
        %665 = vmatprep.subr.mxu0 0.0
        %666 = vmatpush1.msra.mxu0 0.0
        %667 = vmatprep.subr.mxu0 0.0
        %668 = vmatpush1.msra.mxu0 0.0
        %669 = vmatprep.subr.mxu0 0.0
        %670 = vmatpush1.msra.mxu0 0.0
        %671 = vmatprep.subr.mxu0 0.0
        %672 = vmatpush1.msra.mxu0 0.0
        %673 = vmatprep.subr.mxu0 0.0
        %674 = vmatpush1.msra.mxu0 0.0
        %675 = vmatprep.subr.mxu0 0.0
        %676 = vmatpush1.msra.mxu0 0.0
        %677 = vmatprep.subr.mxu0 0.0
        %678 = vmatpush1.msra.mxu0 0.0
        %679 = vmatprep.subr.mxu0 0.0
        %680 = vmatpush1.msra.mxu0 0.0
        %681 = vmatprep.subr.mxu0 0.0
        %682 = vmatpush1.msra.mxu0 0.0
        %683 = vmatprep.subr.mxu0 0.0
        %684 = vmatpush1.msra.mxu0 0.0
        %685 = vmatprep.subr.mxu0 0.0
        %686 = vmatpush1.msra.mxu0 0.0
        %687 = vmatprep.subr.mxu0 0.0
        %688 = vmatpush1.msra.mxu0 0.0
        %689 = vmatprep.subr.mxu0 0.0
        %690 = vmatpush1.msra.mxu0 0.0
        %691 = vmatprep.subr.mxu0 0.0
        %692 = vmatpush1.msra.mxu0 0.0
        %693 = vmatprep.subr.mxu0 0.0
        %694 = vmatpush1.msra.mxu0 0.0
        %695 = vmatprep.subr.mxu0 0.0
        %696 = vmatpush1.msra.mxu0 0.0
        %697 = vmatprep.subr.mxu0 0.0
        %698 = vmatpush1.msra.mxu0 0.0
        %699 = vmatprep.subr.mxu0 0.0
        %700 = vmatpush1.msra.mxu0 0.0
        %701 = vmatprep.subr.mxu0 0.0
        %702 = vmatpush1.msra.mxu0 0.0
        %703 = vmatprep.subr.mxu0 0.0
        %704 = vmatpush1.msra.mxu0 0.0
        %705 = vmatprep.subr.mxu0 0.0
        %706 = vmatpush1.msra.mxu0 0.0
        %707 = vmatprep.subr.mxu0 0.0
        %708 = vmatpush1.msra.mxu0 0.0
        %709 = vmatprep.subr.mxu0 0.0
        %710 = vmatpush1.msra.mxu0 0.0
        %711 = vmatprep.subr.mxu0 0.0
        %712 = vmatpush1.msra.mxu0 0.0
        %713 = vmatprep.subr.mxu0 0.0
        %714 = vmatpush1.msra.mxu0 0.0
        %715 = vmatprep.mubr.f32.mxu0 0.0
        %716 = vmatmul.mubr.f32.gmra.mrb[0].mxu0 %v649
        %v717 = vpop.f32.mrb[0].mxu0
        %v718 = vadd.f32 0.0, %v717
        %v719 = vpop.f32.mrb[0].mxu0
        %720 = vdwg.mxu0
        %v721 = vadd.f32 %v644, %v718
        %v722 = vlaneseq
        %v723 = vshrl.u32 %v722, 7
        %v724 = vsub.s32 0, %v723
        %v725 = vrot.slane %v249, %v724
        %v726 = vadd.f32 %v721, %v725
        %v727 = vxor.u32 %v726, 2147483648
        %v728 = vmul.f32 %v727, 1.442695
        %v729 = vpow.pop %v728
        %v730 = vadd.f32 %v729, 1.0
        %v731 = vrcp.pop %v730
        %v732 = vmul.f32 1.0, %v731
        %v733 = vtanh.pop %v726
        %v734 = vmul.f32 %v732, %v230
        %736 = vrot.lane.b32.xlu0 %v733, 64
        %v737 = vpop.permute.xlu0 %736
        %v739 = vmul.f32 %v732, %v737
        %741 = vrot.lane.b32.xlu0 %v739, 32
        %v742 = vpop.permute.xlu0 %741
        %v744 = vadd.f32 %v734, %v742
        %v745 = vtanh.pop %v744
        %747 = vrot.lane.b32.xlu0 %v745, 64
        %v748 = vpop.permute.xlu0 %747
        %v750 = vmul.f32 %v732, %v748
        %752 = vrot.lane.b32.xlu0 %v750, 32
        %v753 = vpop.permute.xlu0 %752
        %755 = vst.msk [vmem:[#allocation8] sm:$0x3] %vm357, %v753
        %vm756 = vcmask 517376
        %757 = vst.msk [vmem:[#allocation8] sm:$0x3] %vm756, %v744
        %v758 = vlaneseq
        %v759 = vshrl.u32 %v758, 7
        %v760 = vsub.s32 0, %v759
        %v761 = vrot.slane %v250, %v760
        %v762 = vsel %vm647, %v753, 0
        %764 = vmatprep.subr.mxu0 0.0
        %765 = vmatpush1.msra.mxu0 %v245
        %766 = vmatprep.subr.mxu0 0.0
        %767 = vmatpush1.msra.mxu0 %v246
        %768 = vmatprep.subr.mxu0 0.0
        %769 = vmatpush1.msra.mxu0 %v247
        %770 = vmatprep.subr.mxu0 0.0
        %771 = vmatpush1.msra.mxu0 %v248
        %772 = vmatprep.subr.mxu0 0.0
        %773 = vmatpush1.msra.mxu0 0.0
        %774 = vmatprep.subr.mxu0 0.0
        %775 = vmatpush1.msra.mxu0 0.0
        %776 = vmatprep.subr.mxu0 0.0
        %777 = vmatpush1.msra.mxu0 0.0
        %778 = vmatprep.subr.mxu0 0.0
        %779 = vmatpush1.msra.mxu0 0.0
        %780 = vmatprep.subr.mxu0 0.0
        %781 = vmatpush1.msra.mxu0 0.0
        %782 = vmatprep.subr.mxu0 0.0
        %783 = vmatpush1.msra.mxu0 0.0
        %784 = vmatprep.subr.mxu0 0.0
        %785 = vmatpush1.msra.mxu0 0.0
        %786 = vmatprep.subr.mxu0 0.0
        %787 = vmatpush1.msra.mxu0 0.0
        %788 = vmatprep.subr.mxu0 0.0
        %789 = vmatpush1.msra.mxu0 0.0
        %790 = vmatprep.subr.mxu0 0.0
        %791 = vmatpush1.msra.mxu0 0.0
        %792 = vmatprep.subr.mxu0 0.0
        %793 = vmatpush1.msra.mxu0 0.0
        %794 = vmatprep.subr.mxu0 0.0
        %795 = vmatpush1.msra.mxu0 0.0
        %796 = vmatprep.subr.mxu0 0.0
        %797 = vmatpush1.msra.mxu0 0.0
        %798 = vmatprep.subr.mxu0 0.0
        %799 = vmatpush1.msra.mxu0 0.0
        %800 = vmatprep.subr.mxu0 0.0
        %801 = vmatpush1.msra.mxu0 0.0
        %802 = vmatprep.subr.mxu0 0.0
        %803 = vmatpush1.msra.mxu0 0.0
        %804 = vmatprep.subr.mxu0 0.0
        %805 = vmatpush1.msra.mxu0 0.0
        %806 = vmatprep.subr.mxu0 0.0
        %807 = vmatpush1.msra.mxu0 0.0
        %808 = vmatprep.subr.mxu0 0.0
        %809 = vmatpush1.msra.mxu0 0.0
        %810 = vmatprep.subr.mxu0 0.0
        %811 = vmatpush1.msra.mxu0 0.0
        %812 = vmatprep.subr.mxu0 0.0
        %813 = vmatpush1.msra.mxu0 0.0
        %814 = vmatprep.subr.mxu0 0.0
        %815 = vmatpush1.msra.mxu0 0.0
        %816 = vmatprep.subr.mxu0 0.0
        %817 = vmatpush1.msra.mxu0 0.0
        %818 = vmatprep.subr.mxu0 0.0
        %819 = vmatpush1.msra.mxu0 0.0
        %820 = vmatprep.subr.mxu0 0.0
        %821 = vmatpush1.msra.mxu0 0.0
        %822 = vmatprep.subr.mxu0 0.0
        %823 = vmatpush1.msra.mxu0 0.0
        %824 = vmatprep.subr.mxu0 0.0
        %825 = vmatpush1.msra.mxu0 0.0
        %826 = vmatprep.subr.mxu0 0.0
        %827 = vmatpush1.msra.mxu0 0.0
        %828 = vmatprep.mubr.f32.mxu0 0.0
        %829 = vmatmul.mubr.f32.gmra.mrb[0].mxu0 %v762
        %v830 = vpop.f32.mrb[0].mxu0
        %v831 = vadd.f32 %v761, %v830
        %v832 = vpop.f32.mrb[0].mxu0
        %833 = vdwg.mxu0
        %834 = vst [vmem:[%s221] sm:$0x3] %v831
        %s835 = sand.u32 %s121, 1
        %s836 = scalar_lea.sflag [#allocation6], %s835
        %s837 = sand.u32 %s121, 1
        %s838 = smul.addr %s837, 2
        %s839 = scalar_lea.vmem [#allocation7], %s838
        // Predicated region
        $region45: #{tpu_custom_call.1} parent=35 // pred_check
          %p840 = pneg %p131
        $region46: #{tpu_custom_call.1} parent=35 // pred_check_branch
          %842 = sbr.rel (%p840) target = $region48
        $region47: #{tpu_custom_call.1} parent=35 // pred_region
          %s844 = ssub.s32 32, 32
          %845 = vsyncadd %s836, %s844
          %s846 = smul.addr %s29, 32
          %s847 = scalar_lea.hbm %s5, %s846
          %s849 = sshll.u32 %s839, 4
          %s850 = int_to_ptr.vmem [resolvable:$true] %s849
          %852 = dma.vmem_to_hbm [thread:$0]  %s850, 32, %s847, %s836
        $region48: #{tpu_custom_call.1} parent=35 // pred_fallthru
          _
        // Predicated region
        $region49: #{tpu_custom_call.1} parent=35 // pred_check
          %p853 = pneg %p152
        $region50: #{tpu_custom_call.1} parent=35 // pred_check_branch
          %855 = sbr.rel (%p853) target = $region52
        $region51: #{tpu_custom_call.1} parent=35 // pred_region
          %s857 = ssub.s32 32, 32
          %858 = vsyncadd [#allocation9], %s857
          %s860 = sshll.u32 [#allocation8], 4
          %s861 = int_to_ptr.vmem [resolvable:$true] %s860
          %863 = dma.vmem_to_hbm [thread:$0]  %s861, 32, %s6, [#allocation9]
        $region52: #{tpu_custom_call.1} parent=35 // pred_fallthru
          _
        // Predicated region
        $region53: #{tpu_custom_call.1} parent=35 // pred_check
          %p864 = pneg %p152
        $region54: #{tpu_custom_call.1} parent=35 // pred_check_branch
          %866 = sbr.rel (%p864) target = $region56
        $region55: #{tpu_custom_call.1} parent=35 // pred_region
          %867 = dma.done [#allocation9], 32
        $region56: #{tpu_custom_call.1} parent=35 // pred_fallthru
          _
      $region36: #{tpu_custom_call.1} parent=5 // pred_fallthru
        _
      %p868 = scmp.le.s32.totalorder 2, %s24
      // Predicated region
      $region57: #{tpu_custom_call.1} parent=5 // pred_check
        %p869 = pneg %p868
      $region58: #{tpu_custom_call.1} parent=5 // pred_check_branch
        %871 = sbr.rel (%p869) target = $region60
      $region59: #{tpu_custom_call.1} parent=5 // pred_region
        %s872 = ssub.s32 %s24, 2
        // Predicated region
        $region61: #{tpu_custom_call.1} parent=59 // pred_check
          %p873 = pneg %p137
        $region62: #{tpu_custom_call.1} parent=59 // pred_check_branch
          %875 = sbr.rel (%p873) target = $region64
        $region63: #{tpu_custom_call.1} parent=59 // pred_region
          %s876 = sand.u32 %s122, 1
          %s877 = scalar_lea.sflag [#allocation6], %s876
          %s878 = sand.u32 %s122, 1
          %s879 = smul.addr %s878, 2
          %s880 = scalar_lea.vmem [#allocation7], %s879
          %881 = dma.done %s877, 32
        $region64: #{tpu_custom_call.1} parent=59 // pred_fallthru
          _
      $region60: #{tpu_custom_call.1} parent=5 // pred_fallthru
        _
    $region6: #{tpu_custom_call.1} parent=1 // loop_footer
      %s28 = sadd.s32 1, %s24
    $region7: #{tpu_custom_call.1} parent=1 // loop_footer_branch
      %23 = sbr.rel target = $region3
    $region8: #{tpu_custom_call.1} parent=1 // loop_exit
      _
    %882 = vsyncpa [#allocation5], 1
    %s883 = scalar_lea.sflag [#allocation5], 1
    %884 = vsyncpa %s883, 1
    %885 = vsyncpa [#allocation6], 1
    %s886 = scalar_lea.sflag [#allocation6], 1
    %887 = vsyncpa %s886, 1
    %888 = vsyncpa [#allocation9], 1

</llo_original>
